<compile_context>
chip_gen: v6e
topology: v6e:2x2x1
jax: 0.10.0
libtpu: 0.0.40
codegen_flags: <defaults>
</compile_context>

<pallas_src>
import jax
import jax.numpy as jnp
from jax.experimental import pallas as pl
from jax.experimental.pallas import tpu as pltpu


def _round_up(x, m):
    return (x + m - 1) // m * m


def _vmem_capacity_bytes():
    """Physical VMEM per TensorCore (64 MiB on v7x, 128 MiB on v5e/v6e)."""
    try:
        info = pltpu.get_tpu_info()
        cap = getattr(info, "vmem_capacity_bytes", None)
        if cap:
            return int(cap)
    except Exception:
        pass
    return 64 * 1024 * 1024  # conservative fallback (v7x per-TC size)


def _cls_head_kernel(x_ref, w1_ref, b1_ref, w2_ref, b2_ref, o_ref):
    """One (m, n) step of: tanh(x @ w1 + b1) @ w2 + b2, N-tiled.

    x_ref  : [TM, H]   activation row slab (resident across all n steps)
    w1_ref : [H, TN]   first-layer weight N-slice (native/compute dtype)
    b1_ref : [1, TN]   first-layer bias slice (f32)
    w2_ref : [1, TN]   second-layer weight slice stored as a row (f32)
    b2_ref : [1, 1]    second-layer bias (SMEM scalar, f32)
    o_ref  : [1, TM]   lane-dense f32 logits row; doubles as the accumulator
                       (resident across the "arbitrary" n axis).
    """
    n = pl.program_id(1)

    @pl.when(n == 0)
    def _init():
        o_ref[...] = jnp.zeros_like(o_ref)

    # Full-K MXU dot for this N slice, f32 accumulation.
    h_n = jnp.dot(x_ref[...], w1_ref[...], preferred_element_type=jnp.float32)
    h_n = jnp.tanh(h_n + b1_ref[...].astype(jnp.float32))              # [TM, TN]

    # Linear(H, 1) partial: VPU multiply by the matching w2 slice + XLU reduce
    # (avoids an N=1 MXU matmul).  Accumulate into the tiny resident row.
    part = jnp.sum(h_n * w2_ref[...].astype(jnp.float32), axis=-1)     # [TM]
    o_ref[...] += part[None, :]

    @pl.when(n == pl.num_programs(1) - 1)
    def _finalize():
        o_ref[...] += b2_ref[0, 0]


def special_cls_classifier_head(last_hidden_state, num_classes, params, *,
                                block_m=512, compute_dtype=jnp.bfloat16):
    """logits[b, c] = classifier(last_hidden_state[b, 1 + c, :]), c < num_classes."""
    w1, b1, w2_row, b2 = params
    B, S, H = last_hidden_state.shape
    assert S >= 1 + num_classes
    assert w1.shape == (H, H) and b1.shape == (1, H)
    assert w2_row.shape == (1, H) and b2.shape == (1, 1)

    # --- wrapper glue: slice special CLS tokens, flatten ---------------------
    cls_emb = last_hidden_state[:, 1:1 + num_classes, :]           # [B, C, H]
    M = B * num_classes
    x = cls_emb.reshape(M, H)                                      # [M, H]

    # Cast the two big MXU operands to the compute dtype (bf16 by default);
    # small epilogue params stay / become f32.
    if compute_dtype is not None:
        x = x.astype(compute_dtype)
        w1 = w1.astype(compute_dtype)
    else:
        w1 = w1.astype(x.dtype)
    b1 = b1.astype(jnp.float32)
    w2_row = w2_row.astype(jnp.float32)
    b2 = b2.astype(jnp.float32)                                    # SMEM scalar

    itemsize = jnp.dtype(x.dtype).itemsize
    sublane_pack = {1: 32, 2: 16}.get(itemsize, 8)

    # --- VMEM budget (generation-aware; v7x only has 64 MiB/TC) --------------
    vmem_budget = int(0.85 * _vmem_capacity_bytes())
    third = max(1, vmem_budget // 3)

    # N tile: largest divisor of H (multiple of 128) whose double-buffered
    # w1 slab [H, tn] fits ~1/3 of the budget.  Tiny/odd H -> single N step.
    if H % 128 == 0:
        tn = 128
        for cand in (H, 2048, 1024, 512, 256, 128):
            if cand <= H and H % cand == 0 and 2 * H * cand * itemsize <= third:
                tn = cand
                break
    else:
        tn = H
    num_n = H // tn if H % tn == 0 else 1

    # M tile: resident [tm, H] x slab, rounded to the packed sublane count.
    rows_cap = third // max(1, 2 * H * itemsize)
    m_round = _round_up(M, sublane_pack)
    if m_round <= block_m and (m_round <= rows_cap or m_round <= 256):
        tm = m_round                                    # single M tile
    else:
        tm = min(block_m, max(int(rows_cap), 128))
        tm = max(128, (tm // 128) * 128)                # lane-dense output rows
    m_pad = _round_up(M, tm)
    num_m = m_pad // tm
    # TODO(synk): on v7x (2 TensorCores) prefer tm such that num_m is even so
    # the "parallel" M axis shards across both cores for medium M.

    if m_pad != M:
        x = jnp.pad(x, ((0, m_pad - M), (0, 0)))

    # --- VMEM / cost bookkeeping ---------------------------------------------
    out_pad = _round_up(tm, 128)
    par_pad = _round_up(tn, 128)
    vmem_est = (2 * tm * H * itemsize            # x slab buffers
                + 2 * H * tn * itemsize          # w1 N-slice buffers
                + 4 * 8 * par_pad * 4            # b1 + w2 row buffers (padded)
                + 2 * 8 * out_pad * 4            # output row buffers (padded)
                + 2 * tm * tn * 4)               # h tile headroom
    vmem_limit = int(min(vmem_budget, max(32 * 1024 * 1024, 2 * vmem_est)))

    cost = pl.CostEstimate(
        flops=2 * m_pad * H * H + 2 * m_pad * H,
        transcendentals=m_pad * H,
        bytes_accessed=(m_pad * H * itemsize            # x (read once)
                        + num_m * H * H * itemsize      # w1 re-read per M tile
                        + 2 * H * 4 + 4                 # b1, w2, b2
                        + m_pad * 4),                   # logits
    )

    out = pl.pallas_call(
        _cls_head_kernel,
        out_shape=jax.ShapeDtypeStruct((1, m_pad), jnp.float32),
        grid=(num_m, num_n),
        in_specs=[
            pl.BlockSpec((tm, H), lambda m, n: (m, 0)),            # x (resident per m)
            pl.BlockSpec((H, tn), lambda m, n: (0, n)),            # w1 N-slice
            pl.BlockSpec((1, tn), lambda m, n: (0, n)),            # b1 slice
            pl.BlockSpec((1, tn), lambda m, n: (0, n)),            # w2 row slice
            pl.BlockSpec(memory_space=pltpu.MemorySpace.SMEM),     # b2 scalar
        ],
        out_specs=pl.BlockSpec((1, tm), lambda m, n: (0, m)),
        compiler_params=pltpu.CompilerParams(
            dimension_semantics=("parallel", "arbitrary"),
            vmem_limit_bytes=vmem_limit),
        cost_estimate=cost,
    )(x, w1, b1, w2_row, b2)

    return out[0, :M].reshape(B, num_classes)                      # squeeze(-1)


def reference_head(last_hidden_state, num_classes, params):
    w1, b1, w2_row, b2 = params
    cls_emb = last_hidden_state[:, 1:1 + num_classes, :]
    h = jnp.tanh(jnp.einsum("bch,hk->bck", cls_emb, w1) + b1[0])
    return jnp.einsum("bch,h->bc", h, w2_row[0]) + b2[0, 0]


if __name__ == "__main__":
    key = jax.random.PRNGKey(0)
    B, S, H = 2, 8, 32          # batch, seq, hidden_size
    num_classes = 4

    k_hs, k_w1, k_b1, k_w2, k_b2 = jax.random.split(key, 5)

    # Stand-in for base_model(input_ids, attention_mask).last_hidden_state
    last_hidden_state = jax.random.normal(k_hs, (B, S, H), dtype=jnp.float32)

    # Deterministic classifier parameters: Linear(H,H), Linear(H,1)
    # (w2 is stored as a [1, H] row, i.e. torch's [1, H] weight applied as
    # sum(x * w2_row) + b — identical math.)
    w1 = jax.random.normal(k_w1, (H, H), dtype=jnp.float32) * 0.05
    b1 = jax.random.normal(k_b1, (1, H), dtype=jnp.float32) * 0.01
    w2_row = jax.random.normal(k_w2, (1, H), dtype=jnp.float32) * 0.05
    b2 = jax.random.normal(k_b2, (1, 1), dtype=jnp.float32) * 0.01
    params = (w1, b1, w2_row, b2)

    ref = reference_head(last_hidden_state, num_classes, params)

    # Strict check: pure-f32 path.
    logits_f32 = special_cls_classifier_head(
        last_hidden_state, num_classes, params, compute_dtype=None)
    logits_f32 = jax.block_until_ready(logits_f32)
    assert logits_f32.shape == (B, num_classes)
    assert jnp.allclose(logits_f32, ref, atol=1e-5, rtol=1e-5), "f32 mismatch vs reference"

    # Default perf path: bf16 MXU stream, f32 accumulate / epilogue.
    logits_bf16 = special_cls_classifier_head(last_hidden_state, num_classes, params)
    logits_bf16 = jax.block_until_ready(logits_bf16)
    assert logits_bf16.shape == (B, num_classes)
    assert jnp.allclose(logits_bf16, ref, atol=2e-2, rtol=2e-2), "bf16 mismatch vs reference"

    print("KERNEL_OK")
</pallas_src>

<mosaic_0001>
module attributes {stable_mosaic.version = 11 : i64} {
  func.func @_cls_head_kernel(%arg0: i32, %arg1: i32, %arg2: memref<8x32xf32, #tpu.memory_space<vmem>>, %arg3: memref<32x32xf32, #tpu.memory_space<vmem>>, %arg4: memref<1x32xf32, #tpu.memory_space<vmem>>, %arg5: memref<1x32xf32, #tpu.memory_space<vmem>>, %arg6: memref<1x1xf32, #tpu.memory_space<smem>>, %arg7: memref<1x8xf32, #tpu.memory_space<vmem>>) attributes {dimension_semantics = [#tpu.dimension_semantics<parallel>, #tpu.dimension_semantics<arbitrary>], iteration_bounds = array<i64: 1, 1>, scalar_prefetch = 0 : i64, scratch_operands = 0 : i64, tpu.core_type = #tpu.core_type<tc>, window_params = [{transform_indices = @transform_0, window_bounds = array<i64: 8, 32>}, {transform_indices = @transform_1, window_bounds = array<i64: 32, 32>}, {transform_indices = @transform_2, window_bounds = array<i64: 1, 32>}, {transform_indices = @transform_3, window_bounds = array<i64: 1, 32>}, {transform_indices = @transform_4, window_bounds = array<i64: 1, 1>}, {transform_indices = @transform_5, window_bounds = array<i64: 1, 8>}]} {
    %c0_i32 = arith.constant 0 : i32
    %0 = arith.cmpi eq, %arg1, %c0_i32 : i32
    %1 = arith.extui %0 : i1 to i32
    %c0_i32_0 = arith.constant 0 : i32
    %2 = arith.cmpi ne, %1, %c0_i32_0 : i32
    scf.if %2 {
      %cst_15 = arith.constant 0.000000e+00 : f32
      %21 = vector.broadcast %cst_15 : f32 to vector<1x8xf32>
      %c0_16 = arith.constant 0 : index
      %c0_17 = arith.constant 0 : index
      %22 = vector.load %arg7[%c0_16, %c0_17] : memref<1x8xf32, #tpu.memory_space<vmem>>, vector<1x8xf32>
      tpu.vector_store %arg7[%c0_16, %c0_17], %21 {strides = array<i32>} : memref<1x8xf32, #tpu.memory_space<vmem>>, vector<1x8xf32>,
    } else {
    }
    %c0 = arith.constant 0 : index
    %c0_1 = arith.constant 0 : index
    %3 = vector.load %arg2[%c0, %c0_1] : memref<8x32xf32, #tpu.memory_space<vmem>>, vector<8x32xf32>
    %c0_2 = arith.constant 0 : index
    %c0_3 = arith.constant 0 : index
    %4 = vector.load %arg3[%c0_2, %c0_3] : memref<32x32xf32, #tpu.memory_space<vmem>>, vector<32x32xf32>
    %cst = arith.constant dense<0.000000e+00> : vector<8x32xf32>
    %5 = tpu.matmul %3, %4, %cst {dimension_numbers = #tpu.dot_dimension_numbers<[1], [0], [0], [1], [0, 0, 1, 1], [], []>} : vector<8x32xf32>, vector<32x32xf32>, vector<8x32xf32> -> vector<8x32xf32>
    %c0_4 = arith.constant 0 : index
    %c0_5 = arith.constant 0 : index
    %6 = vector.load %arg4[%c0_4, %c0_5] : memref<1x32xf32, #tpu.memory_space<vmem>>, vector<1x32xf32>
    %7 = vector.broadcast %6 : vector<1x32xf32> to vector<8x32xf32>
    %8 = arith.addf %5, %7 : vector<8x32xf32>
    %9 = math.tanh %8 : vector<8x32xf32>
    %c0_6 = arith.constant 0 : index
    %c0_7 = arith.constant 0 : index
    %10 = vector.load %arg5[%c0_6, %c0_7] : memref<1x32xf32, #tpu.memory_space<vmem>>, vector<1x32xf32>
    %11 = vector.broadcast %10 : vector<1x32xf32> to vector<8x32xf32>
    %12 = arith.mulf %9, %11 : vector<8x32xf32>
    %cst_8 = arith.constant dense<0.000000e+00> : vector<8xf32>
    %13 = vector.multi_reduction <add>, %12, %cst_8 [1] : vector<8x32xf32> to vector<8xf32>
    %c0_9 = arith.constant 0 : index
    %c0_10 = arith.constant 0 : index
    %14 = vector.load %arg7[%c0_9, %c0_10] : memref<1x8xf32, #tpu.memory_space<vmem>>, vector<1x8xf32>
    %15 = vector.shape_cast %13 : vector<8xf32> to vector<1x8xf32>
    %16 = arith.addf %14, %15 : vector<1x8xf32>
    %c0_11 = arith.constant 0 : index
    %c0_12 = arith.constant 0 : index
    %17 = vector.load %arg7[%c0_11, %c0_12] : memref<1x8xf32, #tpu.memory_space<vmem>>, vector<1x8xf32>
    tpu.vector_store %arg7[%c0_11, %c0_12], %16 {strides = array<i32>} : memref<1x8xf32, #tpu.memory_space<vmem>>, vector<1x8xf32>,
    %c0_i32_13 = arith.constant 0 : i32
    %18 = arith.cmpi eq, %arg1, %c0_i32_13 : i32
    %19 = arith.extui %18 : i1 to i32
    %c0_i32_14 = arith.constant 0 : i32
    %20 = arith.cmpi ne, %19, %c0_i32_14 : i32
    scf.if %20 {
      %c0_15 = arith.constant 0 : index
      %c0_16 = arith.constant 0 : index
      %21 = vector.load %arg7[%c0_15, %c0_16] : memref<1x8xf32, #tpu.memory_space<vmem>>, vector<1x8xf32>
      %c0_17 = arith.constant 0 : index
      %c0_18 = arith.constant 0 : index
      %22 = memref.load %arg6[%c0_17, %c0_18] : memref<1x1xf32, #tpu.memory_space<smem>>
      %23 = vector.broadcast %22 : f32 to vector<1x8xf32>
      %24 = arith.addf %21, %23 : vector<1x8xf32>
      %c0_19 = arith.constant 0 : index
      %c0_20 = arith.constant 0 : index
      %25 = vector.load %arg7[%c0_19, %c0_20] : memref<1x8xf32, #tpu.memory_space<vmem>>, vector<1x8xf32>
      tpu.vector_store %arg7[%c0_19, %c0_20], %24 {strides = array<i32>} : memref<1x8xf32, #tpu.memory_space<vmem>>, vector<1x8xf32>,
    } else {
    }
    return
  }
  func.func @transform_0(%arg0: i32, %arg1: i32) -> (i32, i32) {
    %c0_i32 = arith.constant 0 : i32
    %c0_i32_0 = arith.constant 0 : i32
    return %arg0, %c0_i32 : i32, i32
  }
  func.func @transform_1(%arg0: i32, %arg1: i32) -> (i32, i32) {
    %c0_i32 = arith.constant 0 : i32
    %c0_i32_0 = arith.constant 0 : i32
    return %c0_i32, %arg1 : i32, i32
  }
  func.func @transform_2(%arg0: i32, %arg1: i32) -> (i32, i32) {
    %c0_i32 = arith.constant 0 : i32
    %c0_i32_0 = arith.constant 0 : i32
    return %c0_i32, %arg1 : i32, i32
  }
  func.func @transform_3(%arg0: i32, %arg1: i32) -> (i32, i32) {
    %c0_i32 = arith.constant 0 : i32
    %c0_i32_0 = arith.constant 0 : i32
    return %c0_i32, %arg1 : i32, i32
  }
  func.func @transform_4(%arg0: i32, %arg1: i32) -> (i32, i32) {
    %c0_i32 = arith.constant 0 : i32
    %c0_i32_0 = arith.constant 0 : i32
    %c0_i32_1 = arith.constant 0 : i32
    return %c0_i32, %c0_i32_0 : i32, i32
  }
  func.func @transform_5(%arg0: i32, %arg1: i32) -> (i32, i32) {
    %c0_i32 = arith.constant 0 : i32
    %c0_i32_0 = arith.constant 0 : i32
    return %c0_i32, %arg0 : i32, i32
  }
}

</mosaic_0001>

<llo_original>
// kernel: tpu_custom_call.1
$region0: #{tpu_custom_call.1}
  #allocation0 [shape = 'u32[]', space=smem, size = 0x4, offset = 0x4, fixed_abs, tag = 'smem constant byte address 0x4 - core index']
  #allocation1 [shape = 'u32[144,128]{1,0:T(1,128)}', space=vmem, size = 0x12000, scoped, tag = 'internal scratch']
  #allocation2 [shape = 'f32[1,1]{1,0:T(1,128)S(6)}', space=smem, size = 0x200, scoped, tag = 'scoped memory for tpu_custom_call.1']
  %s0 = inlined_call_operand.hbm [shape: f32[8,32], index: 0, kind: input, shape index: {}]
  %s1 = inlined_call_operand.hbm [shape: f32[32,32], index: 1, kind: input, shape index: {}]
  %s2 = inlined_call_operand.vmem [shape: f32[1,32], index: 2, kind: input, shape index: {}]
  %s3 = inlined_call_operand.vmem [shape: f32[1,32], index: 3, kind: input, shape index: {}]
  %s4 = inlined_call_operand.<no memory space> [shape: f32[1,1], index: 4, kind: input, shape index: {}]
  %s5 = inlined_call_operand.hbm [shape: f32[1,8], index: 5, kind: output, shape index: {}]
  %s6 = sld [smem:[#allocation0]]
  $region46: #{tpu_custom_call.1} parent=0
    _
  %s8 = ssub.s32 1, %s6
  %s9 = scalar_select 0, %s8, %s6
  %10 = sst [smem:[#allocation2]] %s4
  $region1: #{tpu_custom_call.1} parent=0
    #allocation3 [shape = 'u8[4096]{0}', space=vmem, size = 0x1000, scoped, tag = 'input window, operand 0, single buffered']
    #allocation4 [shape = 's32[1]{0}', space=sflag, size = 0x4, scoped, tag = 'scoped memory for tpu_custom_call.1']
    #allocation5 [shape = 's32[1]{0}', space=sflag, size = 0x4, scoped, tag = 'scoped memory for tpu_custom_call.1']
    #allocation6 [shape = 'u8[16384]{0}', space=vmem, size = 0x4000, scoped, tag = 'input window, operand 1, single buffered']
    #allocation7 [shape = 's32[1]{0}', space=sflag, size = 0x4, scoped, tag = 'scoped memory for tpu_custom_call.1']
    #allocation8 [shape = 'u8[512]{0}', space=vmem, size = 0x400, scoped, tag = 'output window, operand 0, single buffered']
    %11 = vsyncpa [#allocation4], 0
    %12 = vsyncpa [#allocation7], 0
    %13 = vsyncpa [#allocation5], 0
    // Predicated region
    $region2: #{tpu_custom_call.1} parent=1 // pred_check
      _
    $region3: #{tpu_custom_call.1} parent=1 // pred_check_branch
      %15 = sbr.rel (0) target = $region5
    $region4: #{tpu_custom_call.1} parent=1 // pred_region
      %s17 = ssub.s32 128, 128
      %18 = vsyncadd [#allocation4], %s17
      %s20 = sshll.u32 [#allocation3], 4
      %s21 = int_to_ptr.vmem [resolvable:$true] %s20
      %23 = dma.hbm_to_vmem [thread:$0]  %s0, 128, %s21, [#allocation4]
    $region5: #{tpu_custom_call.1} parent=1 // pred_fallthru
      _
    // Predicated region
    $region6: #{tpu_custom_call.1} parent=1 // pred_check
      _
    $region7: #{tpu_custom_call.1} parent=1 // pred_check_branch
      %25 = sbr.rel (0) target = $region9
    $region8: #{tpu_custom_call.1} parent=1 // pred_region
      %s27 = ssub.s32 512, 512
      %28 = vsyncadd [#allocation7], %s27
      %s29 = sshll.u32 [#allocation6], 4
      %s30 = int_to_ptr.vmem [resolvable:$true] %s29
      %35 = dma.hbm_to_vmem [thread:$0]  %s1, 512, %s30, [#allocation7], 128, 128, 8
    $region9: #{tpu_custom_call.1} parent=1 // pred_fallthru
      _
    // Predicated region
    $region10: #{tpu_custom_call.1} parent=1 // pred_check
      _
    $region11: #{tpu_custom_call.1} parent=1 // pred_check_branch
      %37 = sbr.rel (0) target = $region13
    $region12: #{tpu_custom_call.1} parent=1 // pred_region
      _
    $region13: #{tpu_custom_call.1} parent=1 // pred_fallthru
      _
    // Predicated region
    $region14: #{tpu_custom_call.1} parent=1 // pred_check
      _
    $region15: #{tpu_custom_call.1} parent=1 // pred_check_branch
      %39 = sbr.rel (0) target = $region17
    $region16: #{tpu_custom_call.1} parent=1 // pred_region
      _
    $region17: #{tpu_custom_call.1} parent=1 // pred_fallthru
      _
    // Predicated region
    $region18: #{tpu_custom_call.1} parent=1 // pred_check
      _
    $region19: #{tpu_custom_call.1} parent=1 // pred_check_branch
      %41 = sbr.rel (0) target = $region21
    $region20: #{tpu_custom_call.1} parent=1 // pred_region
      _
    $region21: #{tpu_custom_call.1} parent=1 // pred_fallthru
      _
    // Predicated region
    $region22: #{tpu_custom_call.1} parent=1 // pred_check
      _
    $region23: #{tpu_custom_call.1} parent=1 // pred_check_branch
      %43 = sbr.rel (0) target = $region25
    $region24: #{tpu_custom_call.1} parent=1 // pred_region
      %44 = dma.done [#allocation4], 128
    $region25: #{tpu_custom_call.1} parent=1 // pred_fallthru
      _
    // Predicated region
    $region26: #{tpu_custom_call.1} parent=1 // pred_check
      _
    $region27: #{tpu_custom_call.1} parent=1 // pred_check_branch
      %46 = sbr.rel (0) target = $region29
    $region28: #{tpu_custom_call.1} parent=1 // pred_region
      %47 = dma.done [#allocation7], 512
    $region29: #{tpu_custom_call.1} parent=1 // pred_fallthru
      _
    %p48 = scmp.eq.s32.totalorder 0, 0
    // Predicated region
    $region30: #{tpu_custom_call.1} parent=1 // pred_check
      %p49 = pneg %p48
    $region31: #{tpu_custom_call.1} parent=1 // pred_check_branch
      %51 = sbr.rel (%p49) target = $region33
    $region32: #{tpu_custom_call.1} parent=1 // pred_region
      %vm52 = vcmask 57344
      %53 = vst.msk [vmem:[#allocation8] sm:$0x1] %vm52, 0.0
    $region33: #{tpu_custom_call.1} parent=1 // pred_fallthru
      _
    %v54 = vld [vmem:[#allocation3] sm:$0xff]
    %v55 = vld [vmem:[#allocation6] sm:$0xff]
    %v56 = vld [vmem:[#allocation6 + $0x8] sm:$0xff]
    %v57 = vld [vmem:[#allocation6 + $0x10] sm:$0xff]
    %v58 = vld [vmem:[#allocation6 + $0x18] sm:$0xff]
    %v59 = vld [vmem:[%s2] sm:$0x1]
    %v61 = vlaneseq
    %v62 = vshrl.u32 %v61, 7
    %v63 = vsub.s32 0, %v62
    %v64 = vrot.slane %v59, %v63
    %vm66 = vcmask 261120
    %v68 = vsel %vm66, %v54, 0
    %70 = vmatprep.subr.mxu0 0.0
    %71 = vmatpush1.msra.mxu0 0.0
    %72 = vmatprep.subr.mxu0 0.0
    %73 = vmatpush1.msra.mxu0 0.0
    %74 = vmatprep.subr.mxu0 0.0
    %75 = vmatpush1.msra.mxu0 0.0
    %76 = vmatprep.subr.mxu0 0.0
    %77 = vmatpush1.msra.mxu0 0.0
    %78 = vmatprep.subr.mxu0 0.0
    %79 = vmatpush1.msra.mxu0 0.0
    %80 = vmatprep.subr.mxu0 0.0
    %81 = vmatpush1.msra.mxu0 0.0
    %82 = vmatprep.subr.mxu0 0.0
    %83 = vmatpush1.msra.mxu0 0.0
    %84 = vmatprep.subr.mxu0 0.0
    %85 = vmatpush1.msra.mxu0 0.0
    %86 = vmatprep.subr.mxu0 0.0
    %87 = vmatpush1.msra.mxu0 0.0
    %88 = vmatprep.subr.mxu0 0.0
    %89 = vmatpush1.msra.mxu0 0.0
    %90 = vmatprep.subr.mxu0 0.0
    %91 = vmatpush1.msra.mxu0 0.0
    %92 = vmatprep.subr.mxu0 0.0
    %93 = vmatpush1.msra.mxu0 0.0
    %94 = vmatprep.subr.mxu0 0.0
    %95 = vmatpush1.msra.mxu0 %v58
    %96 = vmatprep.subr.mxu0 0.0
    %97 = vmatpush1.msra.mxu0 %v57
    %98 = vmatprep.subr.mxu0 0.0
    %99 = vmatpush1.msra.mxu0 %v56
    %100 = vmatprep.subr.mxu0 0.0
    %101 = vmatpush1.msra.mxu0 %v55
    %102 = vmatprep.subr.mxu0 0.0
    %103 = vmatpush2.msra.mxu0 0.0
    %104 = vmatprep.subr.mxu0 0.0
    %105 = vmatpush2.msra.mxu0 0.0
    %106 = vmatprep.subr.mxu0 0.0
    %107 = vmatpush2.msra.mxu0 0.0
    %108 = vmatprep.subr.mxu0 0.0
    %109 = vmatpush2.msra.mxu0 0.0
    %110 = vmatprep.subr.mxu0 0.0
    %111 = vmatpush2.msra.mxu0 0.0
    %112 = vmatprep.subr.mxu0 0.0
    %113 = vmatpush2.msra.mxu0 0.0
    %114 = vmatprep.subr.mxu0 0.0
    %115 = vmatpush2.msra.mxu0 0.0
    %116 = vmatprep.subr.mxu0 0.0
    %117 = vmatpush2.msra.mxu0 0.0
    %118 = vmatprep.subr.mxu0 0.0
    %119 = vmatpush2.msra.mxu0 0.0
    %120 = vmatprep.subr.mxu0 0.0
    %121 = vmatpush2.msra.mxu0 0.0
    %122 = vmatprep.subr.mxu0 0.0
    %123 = vmatpush2.msra.mxu0 0.0
    %124 = vmatprep.subr.mxu0 0.0
    %125 = vmatpush2.msra.mxu0 0.0
    %126 = vmatprep.subr.mxu0 0.0
    %127 = vmatpush2.msra.mxu0 0.0
    %128 = vmatprep.subr.mxu0 0.0
    %129 = vmatpush2.msra.mxu0 0.0
    %130 = vmatprep.subr.mxu0 0.0
    %131 = vmatpush2.msra.mxu0 0.0
    %132 = vmatprep.subr.mxu0 0.0
    %133 = vmatpush2.msra.mxu0 0.0
    %134 = vmatprep.mubr.f32.mxu0 0.0
    %135 = vmatmul.mubr.f32.gmra.mxu0 %v68
    %v136 = vpop.f32.mrf.mxu0
    %v137 = vadd.f32 %v64, %v136
    %v138 = vpop.f32.mrf.mxu0
    %139 = vdwg.mxu0
    %v140 = vtanh.pop %v137
    %v141 = vld [vmem:[%s3] sm:$0x1]
    %v143 = vlaneseq
    %v144 = vshrl.u32 %v143, 7
    %v145 = vsub.s32 0, %v144
    %v146 = vrot.slane %v141, %v145
    %v148 = vmul.f32 %v140, %v146
    %v149 = vsel %vm66, %v148, 0.0
    %150 = vadd.xlane.f32.xlu0 %v149
    %v151 = vpop.xlane.xlu0 %150
    %v152 = vld [vmem:[#allocation8] sm:$0x1]
    %v154 = vlaneseq
    %v155 = vshrl.u32 %v154, 7
    %v156 = vsub.s32 0, %v155
    %v157 = vrot.slane %v151, %v156
    %v158 = vlaneseq
    %v159 = vshrl.u32 %v158, 7
    %v160 = vsub.s32 1, %v159
    %v161 = vrot.slane %v151, %v160
    %v162 = vlaneseq
    %v163 = vshrl.u32 %v162, 7
    %v164 = vsub.s32 2, %v163
    %v165 = vrot.slane %v151, %v164
    %v166 = vlaneseq
    %v167 = vshrl.u32 %v166, 7
    %v168 = vsub.s32 3, %v167
    %v169 = vrot.slane %v151, %v168
    %v170 = vlaneseq
    %v171 = vshrl.u32 %v170, 7
    %v172 = vsub.s32 4, %v171
    %v173 = vrot.slane %v151, %v172
    %v174 = vlaneseq
    %v175 = vshrl.u32 %v174, 7
    %v176 = vsub.s32 5, %v175
    %v177 = vrot.slane %v151, %v176
    %v178 = vlaneseq
    %v179 = vshrl.u32 %v178, 7
    %v180 = vsub.s32 6, %v179
    %v181 = vrot.slane %v151, %v180
    %v182 = vlaneseq
    %v183 = vshrl.u32 %v182, 7
    %v184 = vsub.s32 7, %v183
    %v185 = vrot.slane %v151, %v184
    %v186 = vcombine.low %v157, %v161
    %v187 = vcombine.low %v165, %v169
    %v188 = vcombine.low %v173, %v177
    %v189 = vcombine.low %v181, %v185
    %v191 = vunpack.c.l.s4 1966171168
    %v192 = vunpack.c.0.s8 %v191
    %v193 = vlaneseq
    %v194 = vshrl.u32 %v193, 7
    %v195 = vsub.s32 %v192, %v194
    %v196 = vrot.slane %v186, %v195
    %v198 = vunpack.c.l.s4 1966171168
    %v199 = vunpack.c.0.s8 %v198
    %v200 = vlaneseq
    %v201 = vshrl.u32 %v200, 7
    %v202 = vsub.s32 %v199, %v201
    %v203 = vrot.slane %v187, %v202
    %v205 = vunpack.c.l.s4 1966171168
    %v206 = vunpack.c.0.s8 %v205
    %v207 = vlaneseq
    %v208 = vshrl.u32 %v207, 7
    %v209 = vsub.s32 %v206, %v208
    %v210 = vrot.slane %v188, %v209
    %v212 = vunpack.c.l.s4 1966171168
    %v213 = vunpack.c.0.s8 %v212
    %v214 = vlaneseq
    %v215 = vshrl.u32 %v214, 7
    %v216 = vsub.s32 %v213, %v215
    %v217 = vrot.slane %v189, %v216
    %v218 = vcombine.low %v196, %v203
    %v219 = vcombine.low %v210, %v217
    %v221 = vunpack.c.l.s4 1966171168
    %v222 = vunpack.c.0.s8 %v221
    %v223 = vlaneseq
    %v224 = vshrl.u32 %v223, 7
    %v225 = vsub.s32 %v222, %v224
    %v226 = vrot.slane %v218, %v225
    %v228 = vunpack.c.l.s4 1966171168
    %v229 = vunpack.c.0.s8 %v228
    %v230 = vlaneseq
    %v231 = vshrl.u32 %v230, 7
    %v232 = vsub.s32 %v229, %v231
    %v233 = vrot.slane %v219, %v232
    %v234 = vcombine.low %v226, %v233
    %235 = vset.pattern.permute.xlu0 0
    %236 = vperm.xlu0 %235, %v234
    %v237 = vpop.permute.xlu0 %236
    %v238 = vlaneseq
    %v239 = vand.u32 %v238, 127
    %v240 = vlaneseq
    %v241 = vshrl.u32 %v240, 7
    %v242 = vsub.s32 %v239, %v241
    %v243 = vrot.slane %v237, %v242
    %v245 = vunpack.c.l.s4 1966171168
    %v246 = vunpack.c.0.s8 %v245
    %v247 = vlaneseq
    %v248 = vshrl.u32 %v247, 7
    %v249 = vsub.s32 %v246, %v248
    %v250 = vrot.slane %v243, %v249
    %v252 = vunpack.c.l.s4 1966171168
    %v253 = vunpack.c.0.s8 %v252
    %v254 = vlaneseq
    %v255 = vshrl.u32 %v254, 7
    %v256 = vsub.s32 %v253, %v255
    %v257 = vrot.slane %v250, %v256
    %v259 = vadd.f32 %v152, %v257
    %vm260 = vcmask 57344
    %261 = vst.msk [vmem:[#allocation8] sm:$0x1] %vm260, %v259
    // Predicated region
    $region34: #{tpu_custom_call.1} parent=1 // pred_check
      %p262 = pneg %p48
    $region35: #{tpu_custom_call.1} parent=1 // pred_check_branch
      %264 = sbr.rel (%p262) target = $region37
    $region36: #{tpu_custom_call.1} parent=1 // pred_region
      %v265 = vld [vmem:[#allocation8] sm:$0x1]
      %s266 = sld [smem:[#allocation2]]
      %v267 = vstv %s266
      %v268 = vadd.f32 %v265, %v267
      %269 = vst.msk [vmem:[#allocation8] sm:$0x1] %vm260, %v268
    $region37: #{tpu_custom_call.1} parent=1 // pred_fallthru
      _
    // Predicated region
    $region38: #{tpu_custom_call.1} parent=1 // pred_check
      _
    $region39: #{tpu_custom_call.1} parent=1 // pred_check_branch
      %271 = sbr.rel (0) target = $region41
    $region40: #{tpu_custom_call.1} parent=1 // pred_region
      %s273 = ssub.s32 16, 16
      %274 = vsyncadd [#allocation5], %s273
      %s276 = sshll.u32 [#allocation8], 4
      %s277 = int_to_ptr.vmem [resolvable:$true] %s276
      %279 = dma.vmem_to_hbm [thread:$0]  %s277, 16, %s5, [#allocation5]
    $region41: #{tpu_custom_call.1} parent=1 // pred_fallthru
      _
    // Predicated region
    $region42: #{tpu_custom_call.1} parent=1 // pred_check
      _
    $region43: #{tpu_custom_call.1} parent=1 // pred_check_branch
      %281 = sbr.rel (0) target = $region45
    $region44: #{tpu_custom_call.1} parent=1 // pred_region
      %282 = dma.done [#allocation5], 16
    $region45: #{tpu_custom_call.1} parent=1 // pred_fallthru
      _
    %283 = vsyncpa [#allocation4], 1
    %284 = vsyncpa [#allocation7], 1
    %285 = vsyncpa [#allocation5], 1

</llo_original>
